<compile_context>
chip_gen: v5e
topology: v5e:2x2
jax: 0.10.0
libtpu: 0.0.40
codegen_flags: <defaults>
</compile_context>

<pallas_src>
import functools

import jax
import jax.numpy as jnp
from jax.experimental import pallas as pl
from jax.experimental.pallas import tpu as pltpu


def _entropy_partial_kernel(x_ref, o_ref, *, eps, num_rows, row_block, needs_mask):
    i = pl.program_id(0)
    x = x_ref[...].astype(jnp.float32)

    if needs_mask:
        # Zero out rows past the true batch size (edge block reads padding).
        row_ids = jax.lax.broadcasted_iota(jnp.int32, x.shape, 0) + i * row_block
        x = jnp.where(row_ids < num_rows, x, 0.0)  # 0 * log(0 + eps) == 0

    val = x * jnp.log(x + jnp.float32(eps))

    # Fold row_block rows down to a lane-dense (8, N) partial: groups of 8
    # sublanes are added vreg-by-vreg on the VPU (no cross-lane reduce here).
    groups = row_block // 8
    partial = jnp.sum(val.reshape(groups, 8, val.shape[-1]), axis=0)
    o_ref[...] = -partial


def _choose_row_block(num_rows: int, n: int, itemsize: int,
                      target_block_bytes: int = 4 << 20) -> int:
    """Largest multiple-of-8 row count whose (rows, N) input block fits budget."""
    rows = max(8, target_block_bytes // max(1, n * itemsize))
    rows = min(rows, max(8, num_rows))      # no point exceeding the batch
    rows = max(8, (rows // 8) * 8)          # multiple of 8 sublanes
    return int(rows)


def entropy_loss(x: jax.Array, eps: float = 1e-07) -> jax.Array:
    """Pallas equivalent of EntropyLoss.forward for arbitrary-rank x."""
    n = x.shape[-1]
    x2 = x.reshape(-1, n)
    num_rows = x2.shape[0]

    row_block = _choose_row_block(num_rows, n, x2.dtype.itemsize)
    num_blocks = int(pl.cdiv(num_rows, row_block))
    needs_mask = (num_rows % row_block) != 0

    kernel = functools.partial(
        _entropy_partial_kernel,
        eps=eps,
        num_rows=num_rows,
        row_block=row_block,
        needs_mask=needs_mask,
    )

    partials = pl.pallas_call(
        kernel,
        out_shape=jax.ShapeDtypeStruct((num_blocks * 8, n), jnp.float32),
        grid_spec=pltpu.PrefetchScalarGridSpec(
            num_scalar_prefetch=0,
            grid=(num_blocks,),
            in_specs=[pl.BlockSpec((row_block, n), lambda i: (i, 0))],
            out_specs=pl.BlockSpec((8, n), lambda i: (i, 0)),
        ),
        compiler_params=pltpu.CompilerParams(
            dimension_semantics=("parallel",),  # each step owns its output block
            vmem_limit_bytes=32 * 1024 * 1024,
        ),
    )(x2)

    # Tiny final cross-lane reduction + mean (multiply by precomputed 1/B).
    return jnp.sum(partials) * jnp.float32(1.0 / num_rows)


if __name__ == "__main__":
    key = jax.random.PRNGKey(0)
    B, N = 18, 128  # non-divisible batch exercises the in-kernel tail mask
    logits = jax.random.normal(key, (B, N), dtype=jnp.float32)
    x = jax.nn.softmax(logits, axis=-1)  # probability-like input, as the loss expects

    result = entropy_loss(x)
    jax.block_until_ready(result)

    # cross-check against plain-JAX reference of the PyTorch semantics
    ref = jnp.mean(-jnp.sum(x * jnp.log(x + 1e-07), axis=-1))
    assert jnp.allclose(result, ref, rtol=1e-5, atol=1e-5), (result, ref)

    print("KERNEL_OK")
</pallas_src>

<mosaic_0001>
module attributes {stable_mosaic.version = 11 : i64} {
  func.func @_entropy_partial_kernel(%arg0: i32, %arg1: memref<16x128xf32, #tpu.memory_space<vmem>>, %arg2: memref<8x128xf32, #tpu.memory_space<vmem>>) attributes {dimension_semantics = [#tpu.dimension_semantics<parallel>], iteration_bounds = array<i64: 2>, scalar_prefetch = 0 : i64, scratch_operands = 0 : i64, tpu.core_type = #tpu.core_type<tc>, window_params = [{transform_indices = @transform_0, window_bounds = array<i64: 16, 128>}, {transform_indices = @transform_1, window_bounds = array<i64: 8, 128>}]} {
    %c0 = arith.constant 0 : index
    %c0_0 = arith.constant 0 : index
    %0 = vector.load %arg1[%c0, %c0_0] : memref<16x128xf32, #tpu.memory_space<vmem>>, vector<16x128xf32>
    %1 = tpu.iota {dimensions = array<i32: 0>} : vector<16x128xi32>
    %c16_i32 = arith.constant 16 : i32
    %2 = arith.muli %arg0, %c16_i32 : i32
    %3 = vector.broadcast %2 : i32 to vector<16x128xi32>
    %4 = arith.addi %1, %3 : vector<16x128xi32>
    %c18_i32 = arith.constant 18 : i32
    %5 = vector.broadcast %c18_i32 : i32 to vector<16x128xi32>
    %6 = arith.cmpi slt, %4, %5 : vector<16x128xi32>
    %cst = arith.constant 0.000000e+00 : f32
    %7 = vector.broadcast %cst : f32 to vector<16x128xf32>
    %8 = arith.select %6, %0, %7 : vector<16x128xi1>, vector<16x128xf32>
    %cst_1 = arith.constant 1.000000e-07 : f32
    %9 = vector.broadcast %cst_1 : f32 to vector<16x128xf32>
    %10 = arith.addf %8, %9 : vector<16x128xf32>
    %11 = math.log %10 : vector<16x128xf32>
    %12 = arith.mulf %8, %11 : vector<16x128xf32>
    %13 = vector.shape_cast %12 : vector<16x128xf32> to vector<2x8x128xf32>
    %cst_2 = arith.constant dense<0.000000e+00> : vector<8x128xf32>
    %14 = vector.multi_reduction <add>, %13, %cst_2 [0] : vector<2x8x128xf32> to vector<8x128xf32>
    %cst_3 = arith.constant 0.000000e+00 : f32
    %15 = vector.broadcast %cst_3 : f32 to vector<8x128xf32>
    %16 = arith.subf %15, %14 : vector<8x128xf32>
    %c0_4 = arith.constant 0 : index
    %c0_5 = arith.constant 0 : index
    %17 = vector.load %arg2[%c0_4, %c0_5] : memref<8x128xf32, #tpu.memory_space<vmem>>, vector<8x128xf32>
    tpu.vector_store %arg2[%c0_4, %c0_5], %16 {strides = array<i32>} : memref<8x128xf32, #tpu.memory_space<vmem>>, vector<8x128xf32>,
    return
  }
  func.func @transform_0(%arg0: i32) -> (i32, i32) {
    %c0_i32 = arith.constant 0 : i32
    %c0_i32_0 = arith.constant 0 : i32
    return %arg0, %c0_i32 : i32, i32
  }
  func.func @transform_1(%arg0: i32) -> (i32, i32) {
    %c0_i32 = arith.constant 0 : i32
    %c0_i32_0 = arith.constant 0 : i32
    return %arg0, %c0_i32 : i32, i32
  }
}

</mosaic_0001>

<llo_original>
// kernel: tpu_custom_call.1
$region0: #{tpu_custom_call.1}
  #allocation0 [shape = 'u32[]', space=smem, size = 0x4, offset = 0x4, fixed_abs, tag = 'smem constant byte address 0x4 - core index']
  #allocation1 [shape = 'u32[72,128]{1,0:T(1,128)}', space=vmem, size = 0x9000, scoped, tag = 'internal scratch']
  %s0 = inlined_call_operand.hbm [shape: f32[18,128], index: 0, kind: input, shape index: {}]
  %s1 = inlined_call_operand.hbm [shape: f32[16,128], index: 1, kind: output, shape index: {}]
  %s2 = sld [smem:[#allocation0]]
  $region41: #{tpu_custom_call.1} parent=0
    _
  %s4 = ssub.s32 1, %s2
  %s5 = scalar_select 0, %s4, %s2
  $region1: #{tpu_custom_call.1} parent=0
    #allocation2 [shape = 'u8[16384]{0}', space=vmem, size = 0x4000, scoped, tag = 'input window, operand 0']
    #allocation3 [shape = 's32[2]{0}', space=sflag, size = 0x8, scoped, tag = 'scoped memory for tpu_custom_call.1']
    #allocation4 [shape = 's32[2]{0}', space=sflag, size = 0x8, scoped, tag = 'scoped memory for tpu_custom_call.1']
    #allocation5 [shape = 'u8[8192]{0}', space=vmem, size = 0x2000, scoped, tag = 'output window, operand 0']
    %6 = vsyncpa [#allocation3], 0
    %s7 = scalar_lea.sflag [#allocation3], 1
    %8 = vsyncpa %s7, 0
    %9 = vsyncpa [#allocation4], 0
    %s10 = scalar_lea.sflag [#allocation4], 1
    %11 = vsyncpa %s10, 0
    loop: start=0, step=1, limit=4
    $region2: #{tpu_custom_call.1} parent=1 // loop_pre_header
      _
    $region3: #{tpu_custom_call.1} parent=1 // loop_header
      %s13 = sphi 0, %s17
      %p14 = scmp.ge.s32.totalorder %s13, 4
      %s23 = sphi 0, %s25
      %s26 = sphi 0, %s23
      %s27 = sphi 0, %s26
      %s43 = sphi 0, %s27
      %s49 = sphi 0, %s51
      %s52 = sphi 0, %s49
      %s53 = sphi 0, %s52
      %s69 = sphi 0, %s53
    $region4: #{tpu_custom_call.1} parent=1 // loop_header_branch
      %16 = sbr.rel (%p14) target = $region8
    $region5: #{tpu_custom_call.1} parent=1 // loop_body
      %s18 = ssub.s32 %s13, 1
      %s19 = ssub.s32 %s13, 2
      %s20 = sadd.s32 %s13, 1
      %s21 = ssub.s32 %s13, %s20
      %p22 = scmp.eq.s32.totalorder %s21, 0
      %s24 = sadd.s32 %s23, 1
      %s25 = scalar_select %p22, %s23, %s24
      %p28 = pneg %p22
      %p29 = scmp.eq.s32.totalorder %s13, 1
      %p30 = por %p28, %p29
      %p31 = scmp.ne.s32.totalorder %s23, %s26
      %p32 = scmp.eq.s32.totalorder %s13, 0
      %p33 = por %p31, %p32
      %p34 = scmp.ne.s32.totalorder %s23, %s26
      %p35 = scmp.eq.s32.totalorder %s18, 1
      %p36 = por %p34, %p35
      %p37 = scmp.ne.s32.totalorder %s26, %s27
      %p38 = scmp.eq.s32.totalorder %s18, 0
      %p39 = por %p37, %p38
      %p40 = scmp.ne.s32.totalorder %s26, %s27
      %p41 = scmp.eq.s32.totalorder %s19, 1
      %p42 = por %p40, %p41
      %p44 = scmp.ne.s32.totalorder %s27, %s43
      %p45 = scmp.eq.s32.totalorder %s19, 0
      %p46 = por %p44, %p45
      %s47 = ssub.s32 %s13, %s20
      %p48 = scmp.eq.s32.totalorder %s47, 0
      %s50 = sadd.s32 %s49, 1
      %s51 = scalar_select %p48, %s49, %s50
      %p54 = pneg %p48
      %p55 = scmp.eq.s32.totalorder %s13, 1
      %p56 = por %p54, %p55
      %p57 = scmp.ne.s32.totalorder %s49, %s52
      %p58 = scmp.eq.s32.totalorder %s13, 0
      %p59 = por %p57, %p58
      %p60 = scmp.ne.s32.totalorder %s49, %s52
      %p61 = scmp.eq.s32.totalorder %s18, 1
      %p62 = por %p60, %p61
      %p63 = scmp.ne.s32.totalorder %s52, %s53
      %p64 = scmp.eq.s32.totalorder %s18, 0
      %p65 = por %p63, %p64
      %p66 = scmp.ne.s32.totalorder %s52, %s53
      %p67 = scmp.eq.s32.totalorder %s19, 1
      %p68 = por %p66, %p67
      %p70 = scmp.ne.s32.totalorder %s53, %s69
      %p71 = scmp.eq.s32.totalorder %s19, 0
      %p72 = por %p70, %p71
      %p73 = scmp.le.s32.totalorder 1, %s13
      %p74 = scmp.lt.s32.totalorder %s13, 3
      %p75 = pnand %p73, %p74
      %p76 = pneg %p75
      // Predicated region
      $region9: #{tpu_custom_call.1} parent=5 // pred_check
        _
      $region10: #{tpu_custom_call.1} parent=5 // pred_check_branch
        %78 = sbr.rel (%p75) target = $region12
      $region11: #{tpu_custom_call.1} parent=5 // pred_region
        %s79 = ssub.s32 %s13, 1
      $region12: #{tpu_custom_call.1} parent=5 // pred_fallthru
        _
      %p80 = scmp.lt.s32.totalorder %s13, 2
      // Predicated region
      $region13: #{tpu_custom_call.1} parent=5 // pred_check
        %p81 = pneg %p80
      $region14: #{tpu_custom_call.1} parent=5 // pred_check_branch
        %83 = sbr.rel (%p81) target = $region16
      $region15: #{tpu_custom_call.1} parent=5 // pred_region
        // Predicated region
        $region17: #{tpu_custom_call.1} parent=15 // pred_check
          %p84 = pneg %p33
        $region18: #{tpu_custom_call.1} parent=15 // pred_check_branch
          %86 = sbr.rel (%p84) target = $region20
        $region19: #{tpu_custom_call.1} parent=15 // pred_region
          %s87 = sand.u32 %s23, 1
          %s88 = scalar_lea.sflag [#allocation3], %s87
          %s89 = sand.u32 %s23, 1
          %s90 = smul.addr %s89, 16
          %s91 = scalar_lea.vmem [#allocation2], %s90
          %s92 = smul.u32 2, %s13
          %s93 = ssub.s32 3, %s92
          %p94 = scmp.lt.s32.totalorder %s93, 2
          %s95 = scalar_select %p94, %s93, 2
          %s96 = smul.u32 8, %s95
          %s97 = ssub.s32 16, %s96
          %s98 = sshll.u32 %s97, 4
          %99 = vsyncadd %s88, %s98
          %p100 = scmp.ne.s32.totalorder 0, %s96
          %s101 = smul.addr %s92, 8
          %s102 = scalar_lea.hbm %s0, %s101
          %s103 = smul.u32 8, %s95
          %s104 = sshll.u32 %s102, 4
          %s105 = int_to_ptr.hbm [resolvable:$true] %s104
          %s106 = sshll.u32 %s91, 4
          %s107 = int_to_ptr.vmem [resolvable:$true] %s106
          %s108 = sshll.u32 %s103, 4
          %112 = dma.hbm_to_vmem [thread:$0]  (%p100), %s105, %s108, %s107, %s88, 128, 128, 8
        $region20: #{tpu_custom_call.1} parent=15 // pred_fallthru
          _
      $region16: #{tpu_custom_call.1} parent=5 // pred_fallthru
        _
      %p113 = scmp.le.s32.totalorder 1, %s13
      %p114 = scmp.lt.s32.totalorder %s13, 3
      %p115 = pnand %p113, %p114
      %p116 = pneg %p115
      // Predicated region
      $region21: #{tpu_custom_call.1} parent=5 // pred_check
        _
      $region22: #{tpu_custom_call.1} parent=5 // pred_check_branch
        %118 = sbr.rel (%p115) target = $region24
      $region23: #{tpu_custom_call.1} parent=5 // pred_region
        %s119 = ssub.s32 %s13, 1
        %s120 = sand.u32 %s26, 1
        %s121 = scalar_lea.sflag [#allocation3], %s120
        %s122 = sand.u32 %s26, 1
        %s123 = smul.addr %s122, 16
        %s124 = scalar_lea.vmem [#allocation2], %s123
        // Predicated region
        $region25: #{tpu_custom_call.1} parent=23 // pred_check
          %p125 = pneg %p39
        $region26: #{tpu_custom_call.1} parent=23 // pred_check_branch
          %127 = sbr.rel (%p125) target = $region28
        $region27: #{tpu_custom_call.1} parent=23 // pred_region
          %129 = dma.done %s121, 256
        $region28: #{tpu_custom_call.1} parent=23 // pred_fallthru
          _
        %s130 = sand.u32 %s26, 1
        %s131 = scalar_lea.sflag [#allocation3], %s130
        %s132 = sand.u32 %s26, 1
        %s133 = smul.addr %s132, 16
        %s134 = scalar_lea.vmem [#allocation2], %s133
        %p135 = pneg %p39
        %p136 = pneg %p36
        %p137 = pneg %p65
        %p138 = pneg %p62
        %s139 = sand.u32 %s52, 1
        %s140 = scalar_lea.sflag [#allocation4], %s139
        %s141 = sand.u32 %s52, 1
        %s142 = smul.addr %s141, 8
        %s143 = scalar_lea.vmem [#allocation5], %s142
        %s144 = smul.u32 2, %s18
        %s145 = ssub.s32 3, %s144
        %p146 = scmp.lt.s32.totalorder %s145, 2
        %s147 = scalar_select %p146, %s145, 2
        %s148 = smul.u32 8, %s147
        %v149 = vld [vmem:[%s124] sm:$0xff]
        %v150 = vld [vmem:[%s124 + $0x8] sm:$0xff]
        %v151 = vlaneseq
        %v152 = vshrl.u32 %v151, 7
        %v153 = vadd.s32 %v152, 8
        %s154 = smul.u32 %s18, 16
        %v155 = vstv %s154
        %v156 = vadd.s32 %v152, %v155
        %v157 = vadd.s32 %v153, %v155
        %vm158 = vcmp.lt.s32.totalorder %v156, 18
        %vm159 = vcmp.lt.s32.totalorder %v157, 18
        %v160 = vsel %vm158, %v149, 0.0
        %v161 = vsel %vm159, %v150, 0.0
        %v162 = vadd.f32 %v160, 1e-07
        %v163 = vadd.f32 %v161, 1e-07
        %v164 = vlog2.pop %v162
        %v165 = vmul.f32 %v164, 0.6931472
        %v166 = vlog2.pop %v163
        %v167 = vmul.f32 %v166, 0.6931472
        %v168 = vmul.f32 %v160, %v165
        %v169 = vmul.f32 %v161, %v167
        %v170 = vadd.f32 %v168, %v169
        %v171 = vsub.f32 0.0, %v170
        %172 = vst [vmem:[%s143] sm:$0xff] %v171
        %s173 = sand.u32 %s52, 1
        %s174 = scalar_lea.sflag [#allocation4], %s173
        %s175 = sand.u32 %s52, 1
        %s176 = smul.addr %s175, 8
        %s177 = scalar_lea.vmem [#allocation5], %s176
        // Predicated region
        $region29: #{tpu_custom_call.1} parent=23 // pred_check
          %p178 = pneg %p62
        $region30: #{tpu_custom_call.1} parent=23 // pred_check_branch
          %180 = sbr.rel (%p178) target = $region32
        $region31: #{tpu_custom_call.1} parent=23 // pred_region
          %182 = vsyncadd %s174, 0
          %s183 = smul.addr %s18, 8
          %s184 = scalar_lea.hbm %s1, %s183
          %s186 = sshll.u32 %s177, 4
          %s187 = int_to_ptr.vmem [resolvable:$true] %s186
          %s188 = sshll.u32 %s184, 4
          %s189 = int_to_ptr.hbm [resolvable:$true] %s188
          %191 = dma.vmem_to_hbm [thread:$0]  %s187, 128, %s189, %s174
        $region32: #{tpu_custom_call.1} parent=23 // pred_fallthru
          _
      $region24: #{tpu_custom_call.1} parent=5 // pred_fallthru
        _
      %p192 = scmp.le.s32.totalorder 2, %s13
      // Predicated region
      $region33: #{tpu_custom_call.1} parent=5 // pred_check
        %p193 = pneg %p192
      $region34: #{tpu_custom_call.1} parent=5 // pred_check_branch
        %195 = sbr.rel (%p193) target = $region36
      $region35: #{tpu_custom_call.1} parent=5 // pred_region
        %s196 = ssub.s32 %s13, 2
        // Predicated region
        $region37: #{tpu_custom_call.1} parent=35 // pred_check
          %p197 = pneg %p68
        $region38: #{tpu_custom_call.1} parent=35 // pred_check_branch
          %199 = sbr.rel (%p197) target = $region40
        $region39: #{tpu_custom_call.1} parent=35 // pred_region
          %s200 = sand.u32 %s53, 1
          %s201 = scalar_lea.sflag [#allocation4], %s200
          %s202 = sand.u32 %s53, 1
          %s203 = smul.addr %s202, 8
          %s204 = scalar_lea.vmem [#allocation5], %s203
          %206 = dma.done %s201, 128
        $region40: #{tpu_custom_call.1} parent=35 // pred_fallthru
          _
      $region36: #{tpu_custom_call.1} parent=5 // pred_fallthru
        _
    $region6: #{tpu_custom_call.1} parent=1 // loop_footer
      %s17 = sadd.s32 1, %s13
    $region7: #{tpu_custom_call.1} parent=1 // loop_footer_branch
      %12 = sbr.rel target = $region3
    $region8: #{tpu_custom_call.1} parent=1 // loop_exit
      _
    %207 = vsyncpa [#allocation3], 1
    %s208 = scalar_lea.sflag [#allocation3], 1
    %209 = vsyncpa %s208, 1
    %210 = vsyncpa [#allocation4], 1
    %s211 = scalar_lea.sflag [#allocation4], 1
    %212 = vsyncpa %s211, 1

</llo_original>
